<compile_context>
chip_gen: v6e
topology: v6e:2x2x1
jax: 0.10.0
libtpu: 0.0.40
codegen_flags: <defaults>
</compile_context>

<pallas_src>
import functools

import jax
import jax.numpy as jnp
from jax.experimental import pallas as pl
from jax.experimental.pallas import tpu as pltpu


def _general_attention_kernel(x_ref, w1_ref, b1_ref, w2_ref, b2_ref, cs_ref,
                              out_ref, *, tile_b, d_cs, fold, approx_recip,
                              precision):
    # MXU matmuls on native operands (MXU truncates f32 to bf16 passes at default
    # precision anyway; the explicit up-cast was pure VPU work).  f32 accumulation.
    h = jnp.dot(x_ref[...], w1_ref[...],
                preferred_element_type=jnp.float32, precision=precision)
    h = jnp.maximum(h + b1_ref[...].astype(jnp.float32), 0.0)   # ReLU (Dropout = id)

    y = jnp.dot(h, w2_ref[...],
                preferred_element_type=jnp.float32, precision=precision)
    y = y + b2_ref[...].astype(jnp.float32)

    cs = cs_ref[...].astype(jnp.float32)
    if fold > 1:
        # lane-dense [tile_b/fold, 128] view -> logical [tile_b, D_cs] rows
        cs = cs.reshape(tile_b, d_cs)

    # softmax(new_cs * y) followed by the module's renormalization, fused:
    #   alpha / sum(alpha) == e / sum(e)   (mathematically identical).
    a = cs * y
    m = jnp.max(a, axis=-1, keepdims=True)
    e = jnp.exp(a - m)
    s = jnp.sum(e, axis=-1, keepdims=True)
    attn = (e * y) * pl.reciprocal(s, approx=approx_recip)

    if fold > 1:
        # back to the lane-dense layout so the store is a full 128-lane vst
        attn = attn.reshape(tile_b // fold, d_cs * fold)
    out_ref[...] = attn.astype(out_ref.dtype)
    # TODO(synk): if the fold/unfold reshapes show up as VMEM round-trips in the
    # bundle, keep the epilogue folded end-to-end with segmented (pltpu.roll) reductions.


def _rup(v, m):
    return -(-int(v) // m) * m


def general_attention_pallas(new_cs, x, w1, b1, w2, b2, *, tile_b=None,
                             out_dtype=None, approx_reciprocal=True,
                             mxu_precision=None):
    """attn = renorm(softmax(new_cs * MLP(x))) * MLP(x), Pallas TPU kernel.

    Streaming dtypes are taken from the caller's arrays (pass bf16 activations to
    halve HBM traffic).  out_dtype defaults to new_cs.dtype.  mxu_precision can be
    jax.lax.Precision.HIGHEST for strict f32 parity (cost hidden under DMA).
    """
    B, D_x = x.shape
    Bc, D_cs = new_cs.shape
    assert B == Bc
    H = w1.shape[1]
    assert w1.shape == (D_x, H) and w2.shape == (H, D_cs)
    b1 = b1.reshape(1, H)
    b2 = b2.reshape(1, D_cs)

    if out_dtype is None:
        out_dtype = new_cs.dtype

    # ---- lane-dense fold for new_cs / out ------------------------------------
    # View the contiguous [B, D_cs] slab as [B/fold, D_cs*fold] with D_cs*fold == 128
    # so output write-back uses full 128-lane stores instead of masked vst.msk.
    fold = 1
    if D_cs < 128 and 128 % D_cs == 0:
        f = 128 // D_cs
        if B % f == 0 and (B // f) >= 8:
            fold = f
    align = 8 * fold            # tile_b multiple of 8*fold -> folded tile rows % 8 == 0

    # ---- batch tile selection --------------------------------------------------
    if tile_b is None:
        tile_b = 4096           # big tiles amortize the ~0.35 us per-step overhead
    tile_b = max(align, _rup(tile_b, align))
    tile_b = min(tile_b, _rup(B, align))       # never bigger than the padded batch

    g = pl.cdiv(B, tile_b)
    # keep >= 2 pipelined steps once the batch is large enough (input prefetch
    # overlaps output write-back); no blanket B/2 cap on single-TC chips.
    if g == 1 and B >= 1024:
        tile_b = max(align, _rup(pl.cdiv(B, 2), align))
        g = pl.cdiv(B, tile_b)
    # prefer an even number of grid steps so both v7x TensorCores stay balanced
    if 3 <= g <= 15 and g % 2 == 1:
        cand = max(align, _rup(pl.cdiv(B, g + 1), align))
        if pl.cdiv(B, cand) % 2 == 0:
            tile_b = cand
            g = pl.cdiv(B, cand)

    # folded views are pure metadata (row-major [B, D_cs] is contiguous)
    cs_in = new_cs.reshape(B // fold, D_cs * fold) if fold > 1 else new_cs
    cs_rows, cs_cols = cs_in.shape
    tile_rows = tile_b // fold

    # ---- VMEM budget: double-buffered I/O tiles + f32 intermediates (generous) --
    est = (2 * tile_b * D_x * x.dtype.itemsize
           + 2 * tile_b * D_cs * new_cs.dtype.itemsize
           + 2 * tile_b * D_cs * jnp.dtype(out_dtype).itemsize
           + 8 * tile_b * max(H, D_cs) * 4
           + 4 * (D_x * H + H + H * D_cs + D_cs) * 4)
    vmem_limit = int(min(max(est, 32 << 20), 48 << 20))

    kernel = functools.partial(_general_attention_kernel,
                               tile_b=tile_b, d_cs=D_cs, fold=fold,
                               approx_recip=approx_reciprocal,
                               precision=mxu_precision)

    out = pl.pallas_call(
        kernel,
        out_shape=jax.ShapeDtypeStruct((cs_rows, cs_cols), out_dtype),
        grid=(g,),
        in_specs=[
            pl.BlockSpec((tile_b, D_x), lambda i: (i, 0)),          # x tile
            pl.BlockSpec((D_x, H), lambda i: (0, 0)),               # W1 (VMEM-resident)
            pl.BlockSpec((1, H), lambda i: (0, 0)),                 # b1 (resident)
            pl.BlockSpec((H, D_cs), lambda i: (0, 0)),              # W2 (resident)
            pl.BlockSpec((1, D_cs), lambda i: (0, 0)),              # b2 (resident)
            pl.BlockSpec((tile_rows, cs_cols), lambda i: (i, 0)),   # new_cs tile
        ],
        out_specs=pl.BlockSpec((tile_rows, cs_cols), lambda i: (i, 0)),
        compiler_params=pltpu.CompilerParams(
            dimension_semantics=("parallel",),
            vmem_limit_bytes=vmem_limit,
        ),
    )(x, w1, b1, w2, b2, cs_in)

    if fold > 1:
        out = out.reshape(B, D_cs)
    return out


def reference_jax(new_cs, x, w1, b1, w2, b2):
    h = jnp.maximum(x @ w1 + b1, 0.0)
    y = h @ w2 + b2
    alpha = jax.nn.softmax(new_cs * y, axis=-1)
    alpha = alpha / jnp.sum(alpha, axis=-1, keepdims=True)
    return alpha * y


def general_attention(new_cs, x, w1, b1, w2, b2, *, min_pallas_batch=64, **kw):
    # Tiny batches are faster through the plain XLA fusion than through the
    # pallas_call fixed overhead; reserve the kernel for large batches.
    if x.shape[0] < min_pallas_batch:
        return reference_jax(new_cs, x, w1, b1.reshape(1, -1), w2, b2.reshape(1, -1))
    return general_attention_pallas(new_cs, x, w1, b1, w2, b2, **kw)


if __name__ == "__main__":
    # Small shapes consistent with the module: D_x=16, hidden=32, D_cs=64, batch=8
    B, D_x, H, D_cs = 8, 16, 32, 64

    key = jax.random.PRNGKey(0)
    k_x, k_cs, k_w1, k_b1, k_w2, k_b2, k_x2, k_cs2 = jax.random.split(key, 8)

    x = jax.random.normal(k_x, (B, D_x), dtype=jnp.float32)
    new_cs = jax.random.normal(k_cs, (B, D_cs), dtype=jnp.float32)

    # Deterministic synthetic parameters (not a checkpoint)
    w1 = jax.random.normal(k_w1, (D_x, H), dtype=jnp.float32) * (1.0 / jnp.sqrt(D_x))
    b1 = jax.random.normal(k_b1, (1, H), dtype=jnp.float32) * 0.01
    w2 = jax.random.normal(k_w2, (H, D_cs), dtype=jnp.float32) * (1.0 / jnp.sqrt(H))
    b2 = jax.random.normal(k_b2, (1, D_cs), dtype=jnp.float32) * 0.01

    # --- test 1: small batch, f32 I/O, exact reciprocal -------------------------
    out = general_attention_pallas(new_cs, x, w1, b1, w2, b2,
                                   approx_reciprocal=False)
    out = jax.block_until_ready(out)
    ref = reference_jax(new_cs, x, w1, b1, w2, b2)
    assert out.shape == (B, D_cs)
    assert jnp.allclose(out, ref, atol=1e-5, rtol=1e-5), "mismatch vs JAX reference (f32)"

    # --- test 2: ragged batch (no wrapper pad/slice), multi-step lane-dense path,
    #     caller-supplied bf16 activations, approximate reciprocal -----------------
    B2 = 200
    x2 = jax.random.normal(k_x2, (B2, D_x), dtype=jnp.float32).astype(jnp.bfloat16)
    cs2 = jax.random.normal(k_cs2, (B2, D_cs), dtype=jnp.float32).astype(jnp.bfloat16)
    out2 = general_attention_pallas(cs2, x2, w1, b1, w2, b2, tile_b=128)
    out2 = jax.block_until_ready(out2)
    ref2 = reference_jax(cs2.astype(jnp.float32), x2.astype(jnp.float32),
                         w1, b1, w2, b2)
    assert out2.shape == (B2, D_cs)
    assert out2.dtype == jnp.bfloat16
    assert jnp.allclose(out2.astype(jnp.float32), ref2, atol=3e-2, rtol=3e-2), \
        "mismatch vs JAX reference (bf16 activations)"

    print("KERNEL_OK")
</pallas_src>

<mosaic_0001>
module attributes {stable_mosaic.version = 11 : i64} {
  func.func @_general_attention_kernel(%arg0: i32, %arg1: memref<8x16xf32, #tpu.memory_space<vmem>>, %arg2: memref<16x32xf32, #tpu.memory_space<vmem>>, %arg3: memref<1x32xf32, #tpu.memory_space<vmem>>, %arg4: memref<32x64xf32, #tpu.memory_space<vmem>>, %arg5: memref<1x64xf32, #tpu.memory_space<vmem>>, %arg6: memref<8x64xf32, #tpu.memory_space<vmem>>, %arg7: memref<8x64xf32, #tpu.memory_space<vmem>>) attributes {dimension_semantics = [#tpu.dimension_semantics<parallel>], iteration_bounds = array<i64: 1>, scalar_prefetch = 0 : i64, scratch_operands = 0 : i64, tpu.core_type = #tpu.core_type<tc>, window_params = [{transform_indices = @transform_0, window_bounds = array<i64: 8, 16>}, {pipeline_mode = #tpu.pipeline_mode<synchronous>, transform_indices = @transform_1, window_bounds = array<i64: 16, 32>}, {pipeline_mode = #tpu.pipeline_mode<synchronous>, transform_indices = @transform_2, window_bounds = array<i64: 1, 32>}, {pipeline_mode = #tpu.pipeline_mode<synchronous>, transform_indices = @transform_3, window_bounds = array<i64: 32, 64>}, {pipeline_mode = #tpu.pipeline_mode<synchronous>, transform_indices = @transform_4, window_bounds = array<i64: 1, 64>}, {transform_indices = @transform_5, window_bounds = array<i64: 8, 64>}, {transform_indices = @transform_6, window_bounds = array<i64: 8, 64>}]} {
    %c0 = arith.constant 0 : index
    %c0_0 = arith.constant 0 : index
    %0 = vector.load %arg1[%c0, %c0_0] : memref<8x16xf32, #tpu.memory_space<vmem>>, vector<8x16xf32>
    %c0_1 = arith.constant 0 : index
    %c0_2 = arith.constant 0 : index
    %1 = vector.load %arg2[%c0_1, %c0_2] : memref<16x32xf32, #tpu.memory_space<vmem>>, vector<16x32xf32>
    %cst = arith.constant dense<0.000000e+00> : vector<8x32xf32>
    %2 = tpu.matmul %0, %1, %cst {dimension_numbers = #tpu.dot_dimension_numbers<[1], [0], [0], [1], [0, 0, 1, 1], [], []>} : vector<8x16xf32>, vector<16x32xf32>, vector<8x32xf32> -> vector<8x32xf32>
    %c0_3 = arith.constant 0 : index
    %c0_4 = arith.constant 0 : index
    %3 = vector.load %arg3[%c0_3, %c0_4] : memref<1x32xf32, #tpu.memory_space<vmem>>, vector<1x32xf32>
    %4 = vector.broadcast %3 : vector<1x32xf32> to vector<8x32xf32>
    %5 = arith.addf %2, %4 : vector<8x32xf32>
    %cst_5 = arith.constant 0.000000e+00 : f32
    %6 = vector.broadcast %cst_5 : f32 to vector<8x32xf32>
    %7 = arith.maximumf %5, %6 : vector<8x32xf32>
    %c0_6 = arith.constant 0 : index
    %c0_7 = arith.constant 0 : index
    %8 = vector.load %arg4[%c0_6, %c0_7] : memref<32x64xf32, #tpu.memory_space<vmem>>, vector<32x64xf32>
    %cst_8 = arith.constant dense<0.000000e+00> : vector<8x64xf32>
    %9 = tpu.matmul %7, %8, %cst_8 {dimension_numbers = #tpu.dot_dimension_numbers<[1], [0], [0], [1], [0, 0, 1, 1], [], []>} : vector<8x32xf32>, vector<32x64xf32>, vector<8x64xf32> -> vector<8x64xf32>
    %c0_9 = arith.constant 0 : index
    %c0_10 = arith.constant 0 : index
    %10 = vector.load %arg5[%c0_9, %c0_10] : memref<1x64xf32, #tpu.memory_space<vmem>>, vector<1x64xf32>
    %11 = vector.broadcast %10 : vector<1x64xf32> to vector<8x64xf32>
    %12 = arith.addf %9, %11 : vector<8x64xf32>
    %c0_11 = arith.constant 0 : index
    %c0_12 = arith.constant 0 : index
    %13 = vector.load %arg6[%c0_11, %c0_12] : memref<8x64xf32, #tpu.memory_space<vmem>>, vector<8x64xf32>
    %14 = arith.mulf %13, %12 : vector<8x64xf32>
    %cst_13 = arith.constant dense<0xFF800000> : vector<8xf32>
    %15 = vector.multi_reduction <maximumf>, %14, %cst_13 [1] : vector<8x64xf32> to vector<8xf32>
    %16 = vector.shape_cast %15 : vector<8xf32> to vector<8x1xf32>
    %17 = vector.broadcast %16 : vector<8x1xf32> to vector<8x64xf32>
    %18 = arith.subf %14, %17 : vector<8x64xf32>
    %19 = math.exp %18 : vector<8x64xf32>
    %cst_14 = arith.constant dense<0.000000e+00> : vector<8xf32>
    %20 = vector.multi_reduction <add>, %19, %cst_14 [1] : vector<8x64xf32> to vector<8xf32>
    %21 = vector.shape_cast %20 : vector<8xf32> to vector<8x1xf32>
    %22 = arith.mulf %19, %12 : vector<8x64xf32>
    %23 = tpu.reciprocal %21 : vector<8x1xf32> -> vector<8x1xf32>
    %24 = vector.broadcast %23 : vector<8x1xf32> to vector<8x64xf32>
    %25 = arith.mulf %22, %24 : vector<8x64xf32>
    %c0_15 = arith.constant 0 : index
    %c0_16 = arith.constant 0 : index
    %26 = vector.load %arg7[%c0_15, %c0_16] : memref<8x64xf32, #tpu.memory_space<vmem>>, vector<8x64xf32>
    tpu.vector_store %arg7[%c0_15, %c0_16], %25 {strides = array<i32>} : memref<8x64xf32, #tpu.memory_space<vmem>>, vector<8x64xf32>,
    return
  }
  func.func @transform_0(%arg0: i32) -> (i32, i32) {
    %c0_i32 = arith.constant 0 : i32
    %c0_i32_0 = arith.constant 0 : i32
    return %arg0, %c0_i32 : i32, i32
  }
  func.func @transform_1(%arg0: i32) -> (i32, i32) {
    %c0_i32 = arith.constant 0 : i32
    %c0_i32_0 = arith.constant 0 : i32
    %c0_i32_1 = arith.constant 0 : i32
    return %c0_i32, %c0_i32_0 : i32, i32
  }
  func.func @transform_2(%arg0: i32) -> (i32, i32) {
    %c0_i32 = arith.constant 0 : i32
    %c0_i32_0 = arith.constant 0 : i32
    %c0_i32_1 = arith.constant 0 : i32
    return %c0_i32, %c0_i32_0 : i32, i32
  }
  func.func @transform_3(%arg0: i32) -> (i32, i32) {
    %c0_i32 = arith.constant 0 : i32
    %c0_i32_0 = arith.constant 0 : i32
    %c0_i32_1 = arith.constant 0 : i32
    return %c0_i32, %c0_i32_0 : i32, i32
  }
  func.func @transform_4(%arg0: i32) -> (i32, i32) {
    %c0_i32 = arith.constant 0 : i32
    %c0_i32_0 = arith.constant 0 : i32
    %c0_i32_1 = arith.constant 0 : i32
    return %c0_i32, %c0_i32_0 : i32, i32
  }
  func.func @transform_5(%arg0: i32) -> (i32, i32) {
    %c0_i32 = arith.constant 0 : i32
    %c0_i32_0 = arith.constant 0 : i32
    return %arg0, %c0_i32 : i32, i32
  }
  func.func @transform_6(%arg0: i32) -> (i32, i32) {
    %c0_i32 = arith.constant 0 : i32
    %c0_i32_0 = arith.constant 0 : i32
    return %arg0, %c0_i32 : i32, i32
  }
}

</mosaic_0001>

<llo_original>
// kernel: tpu_custom_call.1
$region0: #{tpu_custom_call.1}
  #allocation0 [shape = 'u32[]', space=smem, size = 0x4, offset = 0x4, fixed_abs, tag = 'smem constant byte address 0x4 - core index']
  #allocation1 [shape = 'u32[144,128]{1,0:T(1,128)}', space=vmem, size = 0x12000, scoped, tag = 'internal scratch']
  %s0 = inlined_call_operand.hbm [shape: f32[8,16], index: 0, kind: input, shape index: {}]
  %s1 = inlined_call_operand.hbm [shape: f32[16,32], index: 1, kind: input, shape index: {}]
  %s2 = inlined_call_operand.vmem [shape: f32[1,32], index: 2, kind: input, shape index: {}]
  %s3 = inlined_call_operand.hbm [shape: f32[32,64], index: 3, kind: input, shape index: {}]
  %s4 = inlined_call_operand.hbm [shape: f32[1,64], index: 4, kind: input, shape index: {}]
  %s5 = inlined_call_operand.vmem [shape: f32[8,64], index: 5, kind: input, shape index: {}]
  %s6 = inlined_call_operand.hbm [shape: f32[8,64], index: 6, kind: output, shape index: {}]
  %s7 = sld [smem:[#allocation0]]
  $region50: #{tpu_custom_call.1} parent=0
    _
  %s9 = ssub.s32 1, %s7
  %s10 = scalar_select 0, %s9, %s7
  $region1: #{tpu_custom_call.1} parent=0
    #allocation2 [shape = 'u8[4096]{0}', space=vmem, size = 0x1000, scoped, tag = 'input window, operand 0, single buffered']
    #allocation3 [shape = 's32[1]{0}', space=sflag, size = 0x4, scoped, tag = 'scoped memory for tpu_custom_call.1']
    #allocation4 [shape = 's32[1]{0}', space=sflag, size = 0x4, scoped, tag = 'scoped memory for tpu_custom_call.1']
    #allocation5 [shape = 'u8[8192]{0}', space=vmem, size = 0x2000, scoped, tag = 'input window, operand 1, single buffered']
    #allocation6 [shape = 's32[1]{0}', space=sflag, size = 0x4, scoped, tag = 'scoped memory for tpu_custom_call.1']
    #allocation7 [shape = 'u8[16384]{0}', space=vmem, size = 0x4000, scoped, tag = 'input window, operand 3, single buffered']
    #allocation8 [shape = 'u8[512]{0}', space=vmem, size = 0x400, scoped, tag = 'input window, operand 4, single buffered']
    #allocation9 [shape = 's32[1]{0}', space=sflag, size = 0x4, scoped, tag = 'scoped memory for tpu_custom_call.1']
    #allocation10 [shape = 'u8[4096]{0}', space=vmem, size = 0x1000, scoped, tag = 'output window, operand 0, single buffered']
    %11 = vsyncpa [#allocation3], 0
    %12 = vsyncpa [#allocation6], 0
    %13 = vsyncpa [#allocation9], 0
    %14 = vsyncpa [#allocation4], 0
    // Predicated region
    $region2: #{tpu_custom_call.1} parent=1 // pred_check
      _
    $region3: #{tpu_custom_call.1} parent=1 // pred_check_branch
      %16 = sbr.rel (0) target = $region5
    $region4: #{tpu_custom_call.1} parent=1 // pred_region
      %s18 = ssub.s32 128, 128
      %19 = vsyncadd [#allocation3], %s18
      %s21 = sshll.u32 [#allocation2], 4
      %s22 = int_to_ptr.vmem [resolvable:$true] %s21
      %24 = dma.hbm_to_vmem [thread:$0]  %s0, 128, %s22, [#allocation3]
    $region5: #{tpu_custom_call.1} parent=1 // pred_fallthru
      _
    // Predicated region
    $region6: #{tpu_custom_call.1} parent=1 // pred_check
      _
    $region7: #{tpu_custom_call.1} parent=1 // pred_check_branch
      %26 = sbr.rel (0) target = $region9
    $region8: #{tpu_custom_call.1} parent=1 // pred_region
      %s28 = ssub.s32 256, 256
      %29 = vsyncadd [#allocation6], %s28
      %s30 = sshll.u32 [#allocation5], 4
      %s31 = int_to_ptr.vmem [resolvable:$true] %s30
      %36 = dma.hbm_to_vmem [thread:$0]  %s1, 256, %s31, [#allocation6], 128, 128, 8
    $region9: #{tpu_custom_call.1} parent=1 // pred_fallthru
      _
    // Predicated region
    $region10: #{tpu_custom_call.1} parent=1 // pred_check
      _
    $region11: #{tpu_custom_call.1} parent=1 // pred_check_branch
      %38 = sbr.rel (0) target = $region13
    $region12: #{tpu_custom_call.1} parent=1 // pred_region
      _
    $region13: #{tpu_custom_call.1} parent=1 // pred_fallthru
      _
    // Predicated region
    $region14: #{tpu_custom_call.1} parent=1 // pred_check
      _
    $region15: #{tpu_custom_call.1} parent=1 // pred_check_branch
      %40 = sbr.rel (0) target = $region17
    $region16: #{tpu_custom_call.1} parent=1 // pred_region
      %s42 = ssub.s32 512, 512
      %43 = vsyncadd [#allocation6], %s42
      %s44 = sshll.u32 [#allocation7], 4
      %s45 = int_to_ptr.vmem [resolvable:$true] %s44
      %50 = dma.hbm_to_vmem [thread:$0]  %s3, 512, %s45, [#allocation6], 128, 128, 8
    $region17: #{tpu_custom_call.1} parent=1 // pred_fallthru
      _
    // Predicated region
    $region18: #{tpu_custom_call.1} parent=1 // pred_check
      _
    $region19: #{tpu_custom_call.1} parent=1 // pred_check_branch
      %52 = sbr.rel (0) target = $region21
    $region20: #{tpu_custom_call.1} parent=1 // pred_region
      %s54 = ssub.s32 16, 16
      %55 = vsyncadd [#allocation9], %s54
      %s57 = sshll.u32 [#allocation8], 4
      %s58 = int_to_ptr.vmem [resolvable:$true] %s57
      %60 = dma.hbm_to_vmem [thread:$0]  %s4, 16, %s58, [#allocation9]
    $region21: #{tpu_custom_call.1} parent=1 // pred_fallthru
      _
    // Predicated region
    $region22: #{tpu_custom_call.1} parent=1 // pred_check
      _
    $region23: #{tpu_custom_call.1} parent=1 // pred_check_branch
      %62 = sbr.rel (0) target = $region25
    $region24: #{tpu_custom_call.1} parent=1 // pred_region
      _
    $region25: #{tpu_custom_call.1} parent=1 // pred_fallthru
      _
    // Predicated region
    $region26: #{tpu_custom_call.1} parent=1 // pred_check
      _
    $region27: #{tpu_custom_call.1} parent=1 // pred_check_branch
      %64 = sbr.rel (0) target = $region29
    $region28: #{tpu_custom_call.1} parent=1 // pred_region
      %65 = dma.done [#allocation3], 128
    $region29: #{tpu_custom_call.1} parent=1 // pred_fallthru
      _
    // Predicated region
    $region30: #{tpu_custom_call.1} parent=1 // pred_check
      _
    $region31: #{tpu_custom_call.1} parent=1 // pred_check_branch
      %67 = sbr.rel (0) target = $region33
    $region32: #{tpu_custom_call.1} parent=1 // pred_region
      %68 = dma.done [#allocation6], 256
    $region33: #{tpu_custom_call.1} parent=1 // pred_fallthru
      _
    // Predicated region
    $region34: #{tpu_custom_call.1} parent=1 // pred_check
      _
    $region35: #{tpu_custom_call.1} parent=1 // pred_check_branch
      %70 = sbr.rel (0) target = $region37
    $region36: #{tpu_custom_call.1} parent=1 // pred_region
      %71 = dma.done [#allocation6], 512
    $region37: #{tpu_custom_call.1} parent=1 // pred_fallthru
      _
    // Predicated region
    $region38: #{tpu_custom_call.1} parent=1 // pred_check
      _
    $region39: #{tpu_custom_call.1} parent=1 // pred_check_branch
      %73 = sbr.rel (0) target = $region41
    $region40: #{tpu_custom_call.1} parent=1 // pred_region
      %74 = dma.done [#allocation9], 16
    $region41: #{tpu_custom_call.1} parent=1 // pred_fallthru
      _
    %v75 = vld [vmem:[#allocation2] sm:$0xff]
    %v76 = vld [vmem:[#allocation5] sm:$0xff]
    %v77 = vld [vmem:[#allocation5 + $0x8] sm:$0xff]
    %v78 = vld [vmem:[%s2] sm:$0x1]
    %v80 = vlaneseq
    %v81 = vshrl.u32 %v80, 7
    %v82 = vsub.s32 0, %v81
    %v83 = vrot.slane %v78, %v82
    %vm85 = vcmask 130048
    %v87 = vsel %vm85, %v75, 0
    %89 = vmatprep.subr.mxu0 0.0
    %90 = vmatpush1.msra.mxu0 0.0
    %91 = vmatprep.subr.mxu0 0.0
    %92 = vmatpush1.msra.mxu0 0.0
    %93 = vmatprep.subr.mxu0 0.0
    %94 = vmatpush1.msra.mxu0 0.0
    %95 = vmatprep.subr.mxu0 0.0
    %96 = vmatpush1.msra.mxu0 0.0
    %97 = vmatprep.subr.mxu0 0.0
    %98 = vmatpush1.msra.mxu0 0.0
    %99 = vmatprep.subr.mxu0 0.0
    %100 = vmatpush1.msra.mxu0 0.0
    %101 = vmatprep.subr.mxu0 0.0
    %102 = vmatpush1.msra.mxu0 0.0
    %103 = vmatprep.subr.mxu0 0.0
    %104 = vmatpush1.msra.mxu0 0.0
    %105 = vmatprep.subr.mxu0 0.0
    %106 = vmatpush1.msra.mxu0 0.0
    %107 = vmatprep.subr.mxu0 0.0
    %108 = vmatpush1.msra.mxu0 0.0
    %109 = vmatprep.subr.mxu0 0.0
    %110 = vmatpush1.msra.mxu0 0.0
    %111 = vmatprep.subr.mxu0 0.0
    %112 = vmatpush1.msra.mxu0 0.0
    %113 = vmatprep.subr.mxu0 0.0
    %114 = vmatpush1.msra.mxu0 0.0
    %115 = vmatprep.subr.mxu0 0.0
    %116 = vmatpush1.msra.mxu0 0.0
    %117 = vmatprep.subr.mxu0 0.0
    %118 = vmatpush1.msra.mxu0 %v77
    %119 = vmatprep.subr.mxu0 0.0
    %120 = vmatpush1.msra.mxu0 %v76
    %121 = vmatprep.subr.mxu0 0.0
    %122 = vmatpush2.msra.mxu0 0.0
    %123 = vmatprep.subr.mxu0 0.0
    %124 = vmatpush2.msra.mxu0 0.0
    %125 = vmatprep.subr.mxu0 0.0
    %126 = vmatpush2.msra.mxu0 0.0
    %127 = vmatprep.subr.mxu0 0.0
    %128 = vmatpush2.msra.mxu0 0.0
    %129 = vmatprep.subr.mxu0 0.0
    %130 = vmatpush2.msra.mxu0 0.0
    %131 = vmatprep.subr.mxu0 0.0
    %132 = vmatpush2.msra.mxu0 0.0
    %133 = vmatprep.subr.mxu0 0.0
    %134 = vmatpush2.msra.mxu0 0.0
    %135 = vmatprep.subr.mxu0 0.0
    %136 = vmatpush2.msra.mxu0 0.0
    %137 = vmatprep.subr.mxu0 0.0
    %138 = vmatpush2.msra.mxu0 0.0
    %139 = vmatprep.subr.mxu0 0.0
    %140 = vmatpush2.msra.mxu0 0.0
    %141 = vmatprep.subr.mxu0 0.0
    %142 = vmatpush2.msra.mxu0 0.0
    %143 = vmatprep.subr.mxu0 0.0
    %144 = vmatpush2.msra.mxu0 0.0
    %145 = vmatprep.subr.mxu0 0.0
    %146 = vmatpush2.msra.mxu0 0.0
    %147 = vmatprep.subr.mxu0 0.0
    %148 = vmatpush2.msra.mxu0 0.0
    %149 = vmatprep.subr.mxu0 0.0
    %150 = vmatpush2.msra.mxu0 0.0
    %151 = vmatprep.subr.mxu0 0.0
    %152 = vmatpush2.msra.mxu0 0.0
    %153 = vmatprep.mubr.f32.mxu0 0.0
    %154 = vmatmul.mubr.f32.gmra.mxu0 %v87
    %v155 = vpop.f32.mrf.mxu0
    %v156 = vadd.f32 %v83, %v155
    %v157 = vpop.f32.mrf.mxu0
    %158 = vdwg.mxu0
    %v159 = vmax.f32 %v156, 0.0
    %v160 = vld [vmem:[#allocation7] sm:$0xff]
    %v161 = vld [vmem:[#allocation7 + $0x8] sm:$0xff]
    %v162 = vld [vmem:[#allocation7 + $0x10] sm:$0xff]
    %v163 = vld [vmem:[#allocation7 + $0x18] sm:$0xff]
    %v164 = vld [vmem:[#allocation8] sm:$0x1]
    %v166 = vlaneseq
    %v167 = vshrl.u32 %v166, 7
    %v168 = vsub.s32 0, %v167
    %v169 = vrot.slane %v164, %v168
    %vm171 = vcmask 261120
    %v173 = vsel %vm171, %v159, 0
    %175 = vmatprep.subr.mxu0 0.0
    %176 = vmatpush1.msra.mxu0 0.0
    %177 = vmatprep.subr.mxu0 0.0
    %178 = vmatpush1.msra.mxu0 0.0
    %179 = vmatprep.subr.mxu0 0.0
    %180 = vmatpush1.msra.mxu0 0.0
    %181 = vmatprep.subr.mxu0 0.0
    %182 = vmatpush1.msra.mxu0 0.0
    %183 = vmatprep.subr.mxu0 0.0
    %184 = vmatpush1.msra.mxu0 0.0
    %185 = vmatprep.subr.mxu0 0.0
    %186 = vmatpush1.msra.mxu0 0.0
    %187 = vmatprep.subr.mxu0 0.0
    %188 = vmatpush1.msra.mxu0 0.0
    %189 = vmatprep.subr.mxu0 0.0
    %190 = vmatpush1.msra.mxu0 0.0
    %191 = vmatprep.subr.mxu0 0.0
    %192 = vmatpush1.msra.mxu0 0.0
    %193 = vmatprep.subr.mxu0 0.0
    %194 = vmatpush1.msra.mxu0 0.0
    %195 = vmatprep.subr.mxu0 0.0
    %196 = vmatpush1.msra.mxu0 0.0
    %197 = vmatprep.subr.mxu0 0.0
    %198 = vmatpush1.msra.mxu0 0.0
    %199 = vmatprep.subr.mxu0 0.0
    %200 = vmatpush1.msra.mxu0 %v163
    %201 = vmatprep.subr.mxu0 0.0
    %202 = vmatpush1.msra.mxu0 %v162
    %203 = vmatprep.subr.mxu0 0.0
    %204 = vmatpush1.msra.mxu0 %v161
    %205 = vmatprep.subr.mxu0 0.0
    %206 = vmatpush1.msra.mxu0 %v160
    %207 = vmatprep.subr.mxu0 0.0
    %208 = vmatpush2.msra.mxu0 0.0
    %209 = vmatprep.subr.mxu0 0.0
    %210 = vmatpush2.msra.mxu0 0.0
    %211 = vmatprep.subr.mxu0 0.0
    %212 = vmatpush2.msra.mxu0 0.0
    %213 = vmatprep.subr.mxu0 0.0
    %214 = vmatpush2.msra.mxu0 0.0
    %215 = vmatprep.subr.mxu0 0.0
    %216 = vmatpush2.msra.mxu0 0.0
    %217 = vmatprep.subr.mxu0 0.0
    %218 = vmatpush2.msra.mxu0 0.0
    %219 = vmatprep.subr.mxu0 0.0
    %220 = vmatpush2.msra.mxu0 0.0
    %221 = vmatprep.subr.mxu0 0.0
    %222 = vmatpush2.msra.mxu0 0.0
    %223 = vmatprep.subr.mxu0 0.0
    %224 = vmatpush2.msra.mxu0 0.0
    %225 = vmatprep.subr.mxu0 0.0
    %226 = vmatpush2.msra.mxu0 0.0
    %227 = vmatprep.subr.mxu0 0.0
    %228 = vmatpush2.msra.mxu0 0.0
    %229 = vmatprep.subr.mxu0 0.0
    %230 = vmatpush2.msra.mxu0 0.0
    %231 = vmatprep.subr.mxu0 0.0
    %232 = vmatpush2.msra.mxu0 0.0
    %233 = vmatprep.subr.mxu0 0.0
    %234 = vmatpush2.msra.mxu0 0.0
    %235 = vmatprep.subr.mxu0 0.0
    %236 = vmatpush2.msra.mxu0 0.0
    %237 = vmatprep.subr.mxu0 0.0
    %238 = vmatpush2.msra.mxu0 0.0
    %239 = vmatprep.mubr.f32.mxu0 0.0
    %240 = vmatmul.mubr.f32.gmra.mxu0 %v173
    %v241 = vpop.f32.mrf.mxu0
    %v242 = vadd.f32 %v169, %v241
    %v243 = vpop.f32.mrf.mxu0
    %244 = vdwg.mxu0
    %v245 = vld [vmem:[%s5] sm:$0xff]
    %v246 = vmul.f32 %v245, %v242
    %vm247 = vcmask 523264
    %v248 = vsel %vm247, %v246, -inf
    %249 = vmax.xlane.f32.xlu0 %v248
    %v250 = vpop.xlane.xlu0 %249
    %v251 = vsub.f32 %v246, %v250
    %v252 = vmul.f32 %v251, 1.442695
    %v253 = vpow.pop %v252
    %v254 = vsel %vm247, %v253, 0.0
    %255 = vadd.xlane.f32.xlu0 %v254
    %v256 = vpop.xlane.xlu0 %255
    %v257 = vmul.f32 %v253, %v242
    %v258 = vrcp.pop %v256
    %v259 = vmul.f32 %v257, %v258
    %260 = vst.msk [vmem:[#allocation10] sm:$0xff] %vm247, %v259
    // Predicated region
    $region42: #{tpu_custom_call.1} parent=1 // pred_check
      _
    $region43: #{tpu_custom_call.1} parent=1 // pred_check_branch
      %262 = sbr.rel (0) target = $region45
    $region44: #{tpu_custom_call.1} parent=1 // pred_region
      %s264 = ssub.s32 128, 128
      %265 = vsyncadd [#allocation4], %s264
      %s267 = sshll.u32 [#allocation10], 4
      %s268 = int_to_ptr.vmem [resolvable:$true] %s267
      %270 = dma.vmem_to_hbm [thread:$0]  %s268, 128, %s6, [#allocation4]
    $region45: #{tpu_custom_call.1} parent=1 // pred_fallthru
      _
    // Predicated region
    $region46: #{tpu_custom_call.1} parent=1 // pred_check
      _
    $region47: #{tpu_custom_call.1} parent=1 // pred_check_branch
      %272 = sbr.rel (0) target = $region49
    $region48: #{tpu_custom_call.1} parent=1 // pred_region
      %273 = dma.done [#allocation4], 128
    $region49: #{tpu_custom_call.1} parent=1 // pred_fallthru
      _
    %274 = vsyncpa [#allocation3], 1
    %275 = vsyncpa [#allocation6], 1
    %276 = vsyncpa [#allocation9], 1
    %277 = vsyncpa [#allocation4], 1

</llo_original>
